<compile_context>
chip_gen: v6e
topology: v6e:2x2x1
jax: 0.10.0
libtpu: 0.0.40
codegen_flags: <defaults>
</compile_context>

<pallas_src>
import jax
import jax.numpy as jnp
import numpy as np
from jax.experimental import pallas as pl
from jax.experimental.pallas import tpu as pltpu


# ----------------------------------------------------------------------------
# Host-side constant builders (tiny; entries are exactly {0, 0.25, 0.75, 1.0}).
# ----------------------------------------------------------------------------
def _bilinear_2x_matrix(n_in):
    """(2*n_in, n_in) matrix of x2 bilinear upsampling with align_corners=False (PyTorch rule)."""
    n_out = 2 * n_in
    a = np.zeros((n_out, n_in), np.float32)
    for r in range(n_out):
        src = max((r + 0.5) / 2.0 - 0.5, 0.0)          # half-pixel centers, clamped at 0
        i0 = min(int(np.floor(src)), n_in - 1)
        i1 = min(i0 + 1, n_in - 1)
        lam = src - i0
        a[r, i0] += 1.0 - lam
        a[r, i1] += lam
    return a


def _deconv_scatter_matrix(n_in, k):
    """(2*n_in, n_in) scatter matrix of ConvTranspose2d(stride=2, k=4, pad=1) for kernel index k."""
    s = np.zeros((2 * n_in, n_in), np.float32)
    for i in range(n_in):
        o = 2 * i - 1 + k
        if 0 <= o < 2 * n_in:
            s[o, i] = 1.0
    return s


# ----------------------------------------------------------------------------
# Kernel 1: all 16 (ky, kx) channel mixes as one MXU matmul per batch element.
# ----------------------------------------------------------------------------
def _tap_matmul_kernel(x_ref, w_ref, y_ref):
    # x_ref: (1, C_in, H*W) f32   w_ref: (16K, C_in) bf16   y_ref: (1, 16K, H*W) bf16
    x = x_ref[0].astype(jnp.bfloat16)
    y = jnp.dot(w_ref[...], x, preferred_element_type=jnp.float32)
    y_ref[0] = y.astype(y_ref.dtype)


# ----------------------------------------------------------------------------
# Kernel 2: fused deconv scatter + x2 bilinear as per-tap K-batched matmuls + bias.
# ----------------------------------------------------------------------------
def _spatial_upsample_kernel(y_ref, r_ref, c_ref, b_ref, o_ref):
    # y_ref: (1, 16, K, H, W) bf16   r_ref: (16, 4H, H) f32   c_ref: (16, 4W, W) f32
    # b_ref: (K, 1, 4W) f32          o_ref: (1, K, 4H, 4W) f32
    n_taps = y_ref.shape[1]
    k = o_ref.shape[1]
    oh = o_ref.shape[2]
    ow = o_ref.shape[3]
    h = y_ref.shape[3]
    w = y_ref.shape[4]

    # Accumulate in the VMEM-resident f32 output block, starting from the bias.
    o_ref[0] = jnp.broadcast_to(b_ref[...], (k, oh, ow))
    for t in range(n_taps):                              # static unroll over the 16 taps
        y3 = y_ref[0, t].astype(jnp.float32)             # (K, H, W)
        rb = jnp.broadcast_to(r_ref[t], (k, oh, h))      # (K, 4H, H)
        cb = jnp.broadcast_to(c_ref[t], (k, ow, w))      # (K, 4W, W)
        t1 = jnp.einsum('kvh,khw->kvw', rb, y3,
                        preferred_element_type=jnp.float32)        # (K, 4H, W)
        o_ref[0] += jnp.einsum('kvw,kuw->kvu', t1, cb,
                               preferred_element_type=jnp.float32)  # (K, 4H, 4W)


# ----------------------------------------------------------------------------
# Wrapper
# ----------------------------------------------------------------------------
def vote_kpoints_predictor(x, weight, bias):
    """x: (B, C_in, H, W) f32, weight: (C_in, K, 4, 4) f32, bias: (K,) f32 -> (B, K, 4H, 4W) f32."""
    b_sz, c_in, h, w = x.shape
    assert weight.shape[0] == c_in and weight.shape[2:] == (4, 4)
    k = weight.shape[1]
    oh, ow = 4 * h, 4 * w
    tk = 16 * k
    n = h * w

    # -- tiny host-side constants --------------------------------------------------
    # w_all[t*K + kk, c] = weight[c, kk, ky, kx] with t = ky*4 + kx
    w_all = jnp.transpose(weight, (2, 3, 1, 0)).reshape(tk, c_in).astype(jnp.bfloat16)
    a_h = _bilinear_2x_matrix(2 * h)
    a_w = _bilinear_2x_matrix(2 * w)
    r_rows = np.stack([a_h @ _deconv_scatter_matrix(h, ky) for ky in range(4)], 0)  # (4, 4H, H)
    c_cols = np.stack([a_w @ _deconv_scatter_matrix(w, kx) for kx in range(4)], 0)  # (4, 4W, W)
    r_all = jnp.asarray(np.repeat(r_rows, 4, axis=0))     # (16, 4H, H), indexed by t = ky*4 + kx
    c_all = jnp.asarray(np.tile(c_cols, (4, 1, 1)))       # (16, 4W, W)
    bias_row = jnp.broadcast_to(bias.astype(jnp.float32).reshape(k, 1, 1), (k, 1, ow))

    # -- kernel 1 --------------------------------------------------------------------
    x_flat = x.reshape(b_sz, c_in, n)                     # free NCHW reshape, no transpose
    y = pl.pallas_call(
        _tap_matmul_kernel,
        out_shape=jax.ShapeDtypeStruct((b_sz, tk, n), jnp.bfloat16),
        grid=(b_sz,),
        in_specs=[
            pl.BlockSpec((1, c_in, n), lambda i: (i, 0, 0)),
            pl.BlockSpec((tk, c_in), lambda i: (0, 0)),
        ],
        out_specs=pl.BlockSpec((1, tk, n), lambda i: (i, 0, 0)),
        compiler_params=pltpu.CompilerParams(dimension_semantics=("parallel",)),
        cost_estimate=pl.CostEstimate(
            flops=2 * b_sz * tk * n * c_in,
            transcendentals=0,
            bytes_accessed=b_sz * c_in * n * 4 + tk * c_in * 2 + b_sz * tk * n * 2,
        ),
    )(x_flat, w_all)

    # free HBM "pivot": (B, 16K, H*W) -> (B, 16, K, H, W)
    y5 = y.reshape(b_sz, 16, k, h, w)

    # -- kernel 2 --------------------------------------------------------------------
    out = pl.pallas_call(
        _spatial_upsample_kernel,
        out_shape=jax.ShapeDtypeStruct((b_sz, k, oh, ow), jnp.float32),
        grid=(b_sz,),
        in_specs=[
            pl.BlockSpec((1, 16, k, h, w), lambda i: (i, 0, 0, 0, 0)),
            pl.BlockSpec((16, oh, h), lambda i: (0, 0, 0)),
            pl.BlockSpec((16, ow, w), lambda i: (0, 0, 0)),
            pl.BlockSpec((k, 1, ow), lambda i: (0, 0, 0)),
        ],
        out_specs=pl.BlockSpec((1, k, oh, ow), lambda i: (i, 0, 0, 0)),
        compiler_params=pltpu.CompilerParams(dimension_semantics=("parallel",)),
        cost_estimate=pl.CostEstimate(
            flops=2 * b_sz * 16 * (k * oh * h * w + k * oh * ow * w),
            transcendentals=0,
            bytes_accessed=(b_sz * 16 * k * h * w * 2
                            + 16 * (oh * h + ow * w) * 4
                            + k * ow * 4
                            + b_sz * k * oh * ow * 4),
        ),
    )(y5, r_all, c_all, bias_row)
    return out


# ----------------------------------------------------------------------------
# Pure-JAX reference (independent formulation: explicit scatter + gather interp)
# ----------------------------------------------------------------------------
def _reference(x, weight, bias):
    b_sz, _, h, w = x.shape
    k = weight.shape[1]
    # ConvTranspose2d(k=4, s=2, p=1): oy = 2*iy - 1 + ky, ox = 2*ix - 1 + kx
    contrib = jnp.einsum('bchw,ckyx->bkhwyx', x, weight)
    full = jnp.zeros((b_sz, k, 2 * h + 2, 2 * w + 2), jnp.float32)
    for ky in range(4):
        for kx in range(4):
            full = full.at[:, :, ky:ky + 2 * h:2, kx:kx + 2 * w:2].add(contrib[..., ky, kx])
    d = full[:, :, 1:1 + 2 * h, 1:1 + 2 * w] + bias[None, :, None, None]

    # F.interpolate(scale_factor=2, mode='bilinear', align_corners=False)
    def idx_lam(n_in):
        dst = jnp.arange(2 * n_in)
        src = jnp.maximum((dst + 0.5) / 2.0 - 0.5, 0.0)
        i0 = jnp.minimum(jnp.floor(src).astype(jnp.int32), n_in - 1)
        i1 = jnp.minimum(i0 + 1, n_in - 1)
        lam = (src - i0.astype(src.dtype)).astype(jnp.float32)
        return i0, i1, lam

    r0, r1, lr = idx_lam(2 * h)
    c0, c1, lc = idx_lam(2 * w)
    rows = (d[:, :, r0, :] * (1.0 - lr)[None, None, :, None]
            + d[:, :, r1, :] * lr[None, None, :, None])
    out = (rows[:, :, :, c0] * (1.0 - lc)[None, None, None, :]
           + rows[:, :, :, c1] * lc[None, None, None, :])
    return out


if __name__ == "__main__":
    key = jax.random.PRNGKey(0)
    k_x, k_w, k_b = jax.random.split(key, 3)

    batch, in_channels, num_keypoints, h, w = 2, 256, 16, 16, 16
    x = jax.random.normal(k_x, (batch, in_channels, h, w), dtype=jnp.float32)
    weight = jax.random.normal(k_w, (in_channels, num_keypoints, 4, 4), dtype=jnp.float32) * 0.05
    bias = jax.random.normal(k_b, (num_keypoints,), dtype=jnp.float32) * 0.1

    out = jax.block_until_ready(vote_kpoints_predictor(x, weight, bias))
    ref = jax.block_until_ready(_reference(x, weight, bias))

    assert out.shape == (batch, num_keypoints, 4 * h, 4 * w), out.shape
    max_err = float(jnp.max(jnp.abs(out - ref)))
    assert max_err < 5e-2, f"max abs error too large: {max_err}"
    print("KERNEL_OK")
</pallas_src>

<mosaic_0001>
module attributes {stable_mosaic.version = 11 : i64} {
  func.func @_tap_matmul_kernel(%arg0: i32, %arg1: memref<1x256x256xf32, #tpu.memory_space<vmem>>, %arg2: memref<256x256xbf16, #tpu.memory_space<vmem>>, %arg3: memref<1x256x256xbf16, #tpu.memory_space<vmem>>) attributes {dimension_semantics = [#tpu.dimension_semantics<parallel>], iteration_bounds = array<i64: 2>, scalar_prefetch = 0 : i64, scratch_operands = 0 : i64, tpu.core_type = #tpu.core_type<tc>, window_params = [{transform_indices = @transform_0, window_bounds = array<i64: 1, 256, 256>}, {pipeline_mode = #tpu.pipeline_mode<synchronous>, transform_indices = @transform_1, window_bounds = array<i64: 256, 256>}, {transform_indices = @transform_2, window_bounds = array<i64: 1, 256, 256>}]} {
    %c0 = arith.constant 0 : index
    %c0_0 = arith.constant 0 : index
    %c0_1 = arith.constant 0 : index
    %0 = vector.load %arg1[%c0, %c0_0, %c0_1] : memref<1x256x256xf32, #tpu.memory_space<vmem>>, vector<1x256x256xf32>
    %1 = vector.shape_cast %0 : vector<1x256x256xf32> to vector<256x256xf32>
    %2 = arith.truncf %1 : vector<256x256xf32> to vector<256x256xbf16>
    %c0_2 = arith.constant 0 : index
    %c0_3 = arith.constant 0 : index
    %3 = vector.load %arg2[%c0_2, %c0_3] : memref<256x256xbf16, #tpu.memory_space<vmem>>, vector<256x256xbf16>
    %cst = arith.constant dense<0.000000e+00> : vector<256x256xf32>
    %4 = tpu.matmul %3, %2, %cst {dimension_numbers = #tpu.dot_dimension_numbers<[1], [0], [0], [1], [0, 0, 1, 1], [], []>} : vector<256x256xbf16>, vector<256x256xbf16>, vector<256x256xf32> -> vector<256x256xf32>
    %5 = arith.truncf %4 : vector<256x256xf32> to vector<256x256xbf16>
    %c0_4 = arith.constant 0 : index
    %c0_5 = arith.constant 0 : index
    %c0_6 = arith.constant 0 : index
    %6 = vector.load %arg3[%c0_4, %c0_5, %c0_6] : memref<1x256x256xbf16, #tpu.memory_space<vmem>>, vector<1x256x256xbf16>
    %7 = vector.shape_cast %6 : vector<1x256x256xbf16> to vector<256x256xbf16>
    %8 = vector.shape_cast %5 : vector<256x256xbf16> to vector<1x256x256xbf16>
    tpu.vector_store %arg3[%c0_4, %c0_5, %c0_6], %8 {strides = array<i32>} : memref<1x256x256xbf16, #tpu.memory_space<vmem>>, vector<1x256x256xbf16>,
    return
  }
  func.func @transform_0(%arg0: i32) -> (i32, i32, i32) {
    %c0_i32 = arith.constant 0 : i32
    %c0_i32_0 = arith.constant 0 : i32
    %c0_i32_1 = arith.constant 0 : i32
    return %arg0, %c0_i32, %c0_i32_0 : i32, i32, i32
  }
  func.func @transform_1(%arg0: i32) -> (i32, i32) {
    %c0_i32 = arith.constant 0 : i32
    %c0_i32_0 = arith.constant 0 : i32
    %c0_i32_1 = arith.constant 0 : i32
    return %c0_i32, %c0_i32_0 : i32, i32
  }
  func.func @transform_2(%arg0: i32) -> (i32, i32, i32) {
    %c0_i32 = arith.constant 0 : i32
    %c0_i32_0 = arith.constant 0 : i32
    %c0_i32_1 = arith.constant 0 : i32
    return %arg0, %c0_i32, %c0_i32_0 : i32, i32, i32
  }
}

</mosaic_0001>

<llo_original>
// kernel: tpu_custom_call.1
$region0: #{tpu_custom_call.1}
  #allocation0 [shape = 'u32[]', space=smem, size = 0x4, offset = 0x4, fixed_abs, tag = 'smem constant byte address 0x4 - core index']
  #allocation1 [shape = 'u32[144,128]{1,0:T(1,128)}', space=vmem, size = 0x12000, scoped, tag = 'internal scratch']
  %s0 = inlined_call_operand.hbm [shape: f32[2,256,256], index: 0, kind: input, shape index: {}]
  %s1 = inlined_call_operand.hbm [shape: bf16[256,256], index: 1, kind: input, shape index: {}]
  %s2 = inlined_call_operand.hbm [shape: bf16[2,256,256], index: 2, kind: output, shape index: {}]
  %s3 = sld [smem:[#allocation0]]
  $region49: #{tpu_custom_call.1} parent=0
    _
  %s5 = ssub.s32 1, %s3
  %s6 = scalar_select 0, %s5, %s3
  $region1: #{tpu_custom_call.1} parent=0
    #allocation2 [shape = 'u8[524288]{0}', space=vmem, size = 0x80000, scoped, tag = 'input window, operand 0']
    #allocation3 [shape = 's32[2]{0}', space=sflag, size = 0x8, scoped, tag = 'scoped memory for tpu_custom_call.1']
    #allocation4 [shape = 's32[2]{0}', space=sflag, size = 0x8, scoped, tag = 'scoped memory for tpu_custom_call.1']
    #allocation5 [shape = 'u8[131072]{0}', space=vmem, size = 0x20000, scoped, tag = 'input window, operand 1, single buffered']
    #allocation6 [shape = 's32[1]{0}', space=sflag, size = 0x4, scoped, tag = 'scoped memory for tpu_custom_call.1']
    #allocation7 [shape = 'u8[262144]{0}', space=vmem, size = 0x40000, scoped, tag = 'output window, operand 0']
    %7 = vsyncpa [#allocation3], 0
    %s8 = scalar_lea.sflag [#allocation3], 1
    %9 = vsyncpa %s8, 0
    %10 = vsyncpa [#allocation6], 0
    %11 = vsyncpa [#allocation4], 0
    %s12 = scalar_lea.sflag [#allocation4], 1
    %13 = vsyncpa %s12, 0
    loop: start=0, step=1, limit=4
    $region2: #{tpu_custom_call.1} parent=1 // loop_pre_header
      _
    $region3: #{tpu_custom_call.1} parent=1 // loop_header
      %s15 = sphi 0, %s19
      %p16 = scmp.ge.s32.totalorder %s15, 4
      %s25 = sphi 0, %s27
      %s28 = sphi 0, %s25
      %s29 = sphi 0, %s28
      %s45 = sphi 0, %s29
      %s49 = sphi 0, %s49
      %s51 = sphi 0, %s49
      %s52 = sphi 0, %s51
      %s66 = sphi 0, %s52
      %s72 = sphi 0, %s74
      %s75 = sphi 0, %s72
      %s76 = sphi 0, %s75
      %s92 = sphi 0, %s76
    $region4: #{tpu_custom_call.1} parent=1 // loop_header_branch
      %18 = sbr.rel (%p16) target = $region8
    $region5: #{tpu_custom_call.1} parent=1 // loop_body
      %s20 = ssub.s32 %s15, 1
      %s21 = ssub.s32 %s15, 2
      %s22 = sadd.s32 %s15, 1
      %s23 = ssub.s32 %s15, %s22
      %p24 = scmp.eq.s32.totalorder %s23, 0
      %s26 = sadd.s32 %s25, 1
      %s27 = scalar_select %p24, %s25, %s26
      %p30 = pneg %p24
      %p31 = scmp.eq.s32.totalorder %s15, 1
      %p32 = por %p30, %p31
      %p33 = scmp.ne.s32.totalorder %s25, %s28
      %p34 = scmp.eq.s32.totalorder %s15, 0
      %p35 = por %p33, %p34
      %p36 = scmp.ne.s32.totalorder %s25, %s28
      %p37 = scmp.eq.s32.totalorder %s20, 1
      %p38 = por %p36, %p37
      %p39 = scmp.ne.s32.totalorder %s28, %s29
      %p40 = scmp.eq.s32.totalorder %s20, 0
      %p41 = por %p39, %p40
      %p42 = scmp.ne.s32.totalorder %s28, %s29
      %p43 = scmp.eq.s32.totalorder %s21, 1
      %p44 = por %p42, %p43
      %p46 = scmp.ne.s32.totalorder %s29, %s45
      %p47 = scmp.eq.s32.totalorder %s21, 0
      %p48 = por %p46, %p47
      %s50 = sadd.s32 %s49, 1
      %p53 = scmp.eq.s32.totalorder %s15, 1
      %p54 = scmp.ne.s32.totalorder %s49, %s51
      %p55 = scmp.eq.s32.totalorder %s15, 0
      %p56 = por %p54, %p55
      %p57 = scmp.ne.s32.totalorder %s49, %s51
      %p58 = scmp.eq.s32.totalorder %s20, 1
      %p59 = por %p57, %p58
      %p60 = scmp.ne.s32.totalorder %s51, %s52
      %p61 = scmp.eq.s32.totalorder %s20, 0
      %p62 = por %p60, %p61
      %p63 = scmp.ne.s32.totalorder %s51, %s52
      %p64 = scmp.eq.s32.totalorder %s21, 1
      %p65 = por %p63, %p64
      %p67 = scmp.ne.s32.totalorder %s52, %s66
      %p68 = scmp.eq.s32.totalorder %s21, 0
      %p69 = por %p67, %p68
      %s70 = ssub.s32 %s15, %s22
      %p71 = scmp.eq.s32.totalorder %s70, 0
      %s73 = sadd.s32 %s72, 1
      %s74 = scalar_select %p71, %s72, %s73
      %p77 = pneg %p71
      %p78 = scmp.eq.s32.totalorder %s15, 1
      %p79 = por %p77, %p78
      %p80 = scmp.ne.s32.totalorder %s72, %s75
      %p81 = scmp.eq.s32.totalorder %s15, 0
      %p82 = por %p80, %p81
      %p83 = scmp.ne.s32.totalorder %s72, %s75
      %p84 = scmp.eq.s32.totalorder %s20, 1
      %p85 = por %p83, %p84
      %p86 = scmp.ne.s32.totalorder %s75, %s76
      %p87 = scmp.eq.s32.totalorder %s20, 0
      %p88 = por %p86, %p87
      %p89 = scmp.ne.s32.totalorder %s75, %s76
      %p90 = scmp.eq.s32.totalorder %s21, 1
      %p91 = por %p89, %p90
      %p93 = scmp.ne.s32.totalorder %s76, %s92
      %p94 = scmp.eq.s32.totalorder %s21, 0
      %p95 = por %p93, %p94
      %p96 = scmp.le.s32.totalorder 1, %s15
      %p97 = scmp.lt.s32.totalorder %s15, 3
      %p98 = pnand %p96, %p97
      %p99 = pneg %p98
      // Predicated region
      $region9: #{tpu_custom_call.1} parent=5 // pred_check
        _
      $region10: #{tpu_custom_call.1} parent=5 // pred_check_branch
        %101 = sbr.rel (%p98) target = $region12
      $region11: #{tpu_custom_call.1} parent=5 // pred_region
        %s102 = ssub.s32 %s15, 1
        // Predicated region
        $region13: #{tpu_custom_call.1} parent=11 // pred_check
          %p103 = pneg %p62
        $region14: #{tpu_custom_call.1} parent=11 // pred_check_branch
          %105 = sbr.rel (%p103) target = $region16
        $region15: #{tpu_custom_call.1} parent=11 // pred_region
          %s107 = ssub.s32 4096, 4096
          %108 = vsyncadd [#allocation6], %s107
          %s109 = sshll.u32 [#allocation5], 4
          %s110 = int_to_ptr.vmem [resolvable:$true] %s109
          %115 = dma.hbm_to_vmem [thread:$0]  %s1, 4096, %s110, [#allocation6], 128, 128, 8
        $region16: #{tpu_custom_call.1} parent=11 // pred_fallthru
          _
      $region12: #{tpu_custom_call.1} parent=5 // pred_fallthru
        _
      %p116 = scmp.lt.s32.totalorder %s15, 2
      // Predicated region
      $region17: #{tpu_custom_call.1} parent=5 // pred_check
        %p117 = pneg %p116
      $region18: #{tpu_custom_call.1} parent=5 // pred_check_branch
        %119 = sbr.rel (%p117) target = $region20
      $region19: #{tpu_custom_call.1} parent=5 // pred_region
        // Predicated region
        $region21: #{tpu_custom_call.1} parent=19 // pred_check
          %p120 = pneg %p35
        $region22: #{tpu_custom_call.1} parent=19 // pred_check_branch
          %122 = sbr.rel (%p120) target = $region24
        $region23: #{tpu_custom_call.1} parent=19 // pred_region
          %s123 = sand.u32 %s25, 1
          %s124 = scalar_lea.sflag [#allocation3], %s123
          %s125 = sand.u32 %s25, 1
          %s126 = smul.addr %s125, 512
          %s127 = scalar_lea.vmem [#allocation2], %s126
          %s129 = ssub.s32 8192, 8192
          %130 = vsyncadd %s124, %s129
          %s131 = smul.addr %s15, 64
          %s132 = smul.addr %s131, 128
          %s133 = scalar_lea.hbm %s0, %s132
          %s134 = sshll.u32 %s127, 4
          %s135 = int_to_ptr.vmem [resolvable:$true] %s134
          %140 = dma.hbm_to_vmem [thread:$0]  %s133, 8192, %s135, %s124, 256, 256, 16
        $region24: #{tpu_custom_call.1} parent=19 // pred_fallthru
          _
      $region20: #{tpu_custom_call.1} parent=5 // pred_fallthru
        _
      %p141 = scmp.le.s32.totalorder 1, %s15
      %p142 = scmp.lt.s32.totalorder %s15, 3
      %p143 = pnand %p141, %p142
      %p144 = pneg %p143
      // Predicated region
      $region25: #{tpu_custom_call.1} parent=5 // pred_check
        _
      $region26: #{tpu_custom_call.1} parent=5 // pred_check_branch
        %146 = sbr.rel (%p143) target = $region28
      $region27: #{tpu_custom_call.1} parent=5 // pred_region
        %s147 = ssub.s32 %s15, 1
        %s148 = sand.u32 %s28, 1
        %s149 = scalar_lea.sflag [#allocation3], %s148
        %s150 = sand.u32 %s28, 1
        %s151 = smul.addr %s150, 512
        %s152 = scalar_lea.vmem [#allocation2], %s151
        // Predicated region
        $region29: #{tpu_custom_call.1} parent=27 // pred_check
          %p153 = pneg %p41
        $region30: #{tpu_custom_call.1} parent=27 // pred_check_branch
          %155 = sbr.rel (%p153) target = $region32
        $region31: #{tpu_custom_call.1} parent=27 // pred_region
          %156 = dma.done %s149, 8192
        $region32: #{tpu_custom_call.1} parent=27 // pred_fallthru
          _
        // Predicated region
        $region33: #{tpu_custom_call.1} parent=27 // pred_check
          %p157 = pneg %p62
        $region34: #{tpu_custom_call.1} parent=27 // pred_check_branch
          %159 = sbr.rel (%p157) target = $region36
        $region35: #{tpu_custom_call.1} parent=27 // pred_region
          %160 = dma.done [#allocation6], 4096
        $region36: #{tpu_custom_call.1} parent=27 // pred_fallthru
          _
        %s161 = sand.u32 %s28, 1
        %s162 = scalar_lea.sflag [#allocation3], %s161
        %s163 = sand.u32 %s28, 1
        %s164 = smul.addr %s163, 512
        %s165 = scalar_lea.vmem [#allocation2], %s164
        %p166 = pneg %p41
        %p167 = pneg %p38
        %p168 = pneg %p62
        %p169 = pneg %p59
        %p170 = pneg %p88
        %p171 = pneg %p85
        %s172 = sand.u32 %s75, 1
        %s173 = scalar_lea.sflag [#allocation4], %s172
        %s174 = sand.u32 %s75, 1
        %s175 = smul.addr %s174, 256
        %s176 = scalar_lea.vmem [#allocation7], %s175
        %v177 = vld [vmem:[%s152] sm:$0xff]
        %v178 = vld [vmem:[%s152 + $0x8] sm:$0xff]
        %v179 = vld [vmem:[%s152 + $0x10] sm:$0xff]
        %v180 = vld [vmem:[%s152 + $0x18] sm:$0xff]
        %v181 = vld [vmem:[%s152 + $0x20] sm:$0xff]
        %v182 = vld [vmem:[%s152 + $0x28] sm:$0xff]
        %v183 = vld [vmem:[%s152 + $0x30] sm:$0xff]
        %v184 = vld [vmem:[%s152 + $0x38] sm:$0xff]
        %v185 = vld [vmem:[%s152 + $0x40] sm:$0xff]
        %v186 = vld [vmem:[%s152 + $0x48] sm:$0xff]
        %v187 = vld [vmem:[%s152 + $0x50] sm:$0xff]
        %v188 = vld [vmem:[%s152 + $0x58] sm:$0xff]
        %v189 = vld [vmem:[%s152 + $0x60] sm:$0xff]
        %v190 = vld [vmem:[%s152 + $0x68] sm:$0xff]
        %v191 = vld [vmem:[%s152 + $0x70] sm:$0xff]
        %v192 = vld [vmem:[%s152 + $0x78] sm:$0xff]
        %v193 = vld [vmem:[%s152 + $0x80] sm:$0xff]
        %v194 = vld [vmem:[%s152 + $0x88] sm:$0xff]
        %v195 = vld [vmem:[%s152 + $0x90] sm:$0xff]
        %v196 = vld [vmem:[%s152 + $0x98] sm:$0xff]
        %v197 = vld [vmem:[%s152 + $0xa0] sm:$0xff]
        %v198 = vld [vmem:[%s152 + $0xa8] sm:$0xff]
        %v199 = vld [vmem:[%s152 + $0xb0] sm:$0xff]
        %v200 = vld [vmem:[%s152 + $0xb8] sm:$0xff]
        %v201 = vld [vmem:[%s152 + $0xc0] sm:$0xff]
        %v202 = vld [vmem:[%s152 + $0xc8] sm:$0xff]
        %v203 = vld [vmem:[%s152 + $0xd0] sm:$0xff]
        %v204 = vld [vmem:[%s152 + $0xd8] sm:$0xff]
        %v205 = vld [vmem:[%s152 + $0xe0] sm:$0xff]
        %v206 = vld [vmem:[%s152 + $0xe8] sm:$0xff]
        %v207 = vld [vmem:[%s152 + $0xf0] sm:$0xff]
        %v208 = vld [vmem:[%s152 + $0xf8] sm:$0xff]
        %v209 = vld [vmem:[%s152 + $0x100] sm:$0xff]
        %v210 = vld [vmem:[%s152 + $0x108] sm:$0xff]
        %v211 = vld [vmem:[%s152 + $0x110] sm:$0xff]
        %v212 = vld [vmem:[%s152 + $0x118] sm:$0xff]
        %v213 = vld [vmem:[%s152 + $0x120] sm:$0xff]
        %v214 = vld [vmem:[%s152 + $0x128] sm:$0xff]
        %v215 = vld [vmem:[%s152 + $0x130] sm:$0xff]
        %v216 = vld [vmem:[%s152 + $0x138] sm:$0xff]
        %v217 = vld [vmem:[%s152 + $0x140] sm:$0xff]
        %v218 = vld [vmem:[%s152 + $0x148] sm:$0xff]
        %v219 = vld [vmem:[%s152 + $0x150] sm:$0xff]
        %v220 = vld [vmem:[%s152 + $0x158] sm:$0xff]
        %v221 = vld [vmem:[%s152 + $0x160] sm:$0xff]
        %v222 = vld [vmem:[%s152 + $0x168] sm:$0xff]
        %v223 = vld [vmem:[%s152 + $0x170] sm:$0xff]
        %v224 = vld [vmem:[%s152 + $0x178] sm:$0xff]
        %v225 = vld [vmem:[%s152 + $0x180] sm:$0xff]
        %v226 = vld [vmem:[%s152 + $0x188] sm:$0xff]
        %v227 = vld [vmem:[%s152 + $0x190] sm:$0xff]
        %v228 = vld [vmem:[%s152 + $0x198] sm:$0xff]
        %v229 = vld [vmem:[%s152 + $0x1a0] sm:$0xff]
        %v230 = vld [vmem:[%s152 + $0x1a8] sm:$0xff]
        %v231 = vld [vmem:[%s152 + $0x1b0] sm:$0xff]
        %v232 = vld [vmem:[%s152 + $0x1b8] sm:$0xff]
        %v233 = vld [vmem:[%s152 + $0x1c0] sm:$0xff]
        %v234 = vld [vmem:[%s152 + $0x1c8] sm:$0xff]
        %v235 = vld [vmem:[%s152 + $0x1d0] sm:$0xff]
        %v236 = vld [vmem:[%s152 + $0x1d8] sm:$0xff]
        %v237 = vld [vmem:[%s152 + $0x1e0] sm:$0xff]
        %v238 = vld [vmem:[%s152 + $0x1e8] sm:$0xff]
        %v239 = vld [vmem:[%s152 + $0x1f0] sm:$0xff]
        %v240 = vld [vmem:[%s152 + $0x1f8] sm:$0xff]
        %v241 = vpack.c.bf16 %v179, %v177
        %v242 = vpack.c.bf16 %v180, %v178
        %v243 = vpack.c.bf16 %v183, %v181
        %v244 = vpack.c.bf16 %v184, %v182
        %v245 = vpack.c.bf16 %v187, %v185
        %v246 = vpack.c.bf16 %v188, %v186
        %v247 = vpack.c.bf16 %v191, %v189
        %v248 = vpack.c.bf16 %v192, %v190
        %v249 = vpack.c.bf16 %v195, %v193
        %v250 = vpack.c.bf16 %v196, %v194
        %v251 = vpack.c.bf16 %v199, %v197
        %v252 = vpack.c.bf16 %v200, %v198
        %v253 = vpack.c.bf16 %v203, %v201
        %v254 = vpack.c.bf16 %v204, %v202
        %v255 = vpack.c.bf16 %v207, %v205
        %v256 = vpack.c.bf16 %v208, %v206
        %v257 = vpack.c.bf16 %v211, %v209
        %v258 = vpack.c.bf16 %v212, %v210
        %v259 = vpack.c.bf16 %v215, %v213
        %v260 = vpack.c.bf16 %v216, %v214
        %v261 = vpack.c.bf16 %v219, %v217
        %v262 = vpack.c.bf16 %v220, %v218
        %v263 = vpack.c.bf16 %v223, %v221
        %v264 = vpack.c.bf16 %v224, %v222
        %v265 = vpack.c.bf16 %v227, %v225
        %v266 = vpack.c.bf16 %v228, %v226
        %v267 = vpack.c.bf16 %v231, %v229
        %v268 = vpack.c.bf16 %v232, %v230
        %v269 = vpack.c.bf16 %v235, %v233
        %v270 = vpack.c.bf16 %v236, %v234
        %v271 = vpack.c.bf16 %v239, %v237
        %v272 = vpack.c.bf16 %v240, %v238
        %v273 = vld [vmem:[#allocation5] sm:$0xff]
        %v274 = vld [vmem:[#allocation5 + $0x8] sm:$0xff]
        %v275 = vld [vmem:[#allocation5 + $0x10] sm:$0xff]
        %v276 = vld [vmem:[#allocation5 + $0x18] sm:$0xff]
        %v277 = vld [vmem:[#allocation5 + $0x20] sm:$0xff]
        %v278 = vld [vmem:[#allocation5 + $0x28] sm:$0xff]
        %v279 = vld [vmem:[#allocation5 + $0x30] sm:$0xff]
        %v280 = vld [vmem:[#allocation5 + $0x38] sm:$0xff]
        %v281 = vld [vmem:[#allocation5 + $0x40] sm:$0xff]
        %v282 = vld [vmem:[#allocation5 + $0x48] sm:$0xff]
        %v283 = vld [vmem:[#allocation5 + $0x50] sm:$0xff]
        %v284 = vld [vmem:[#allocation5 + $0x58] sm:$0xff]
        %v285 = vld [vmem:[#allocation5 + $0x60] sm:$0xff]
        %v286 = vld [vmem:[#allocation5 + $0x68] sm:$0xff]
        %v287 = vld [vmem:[#allocation5 + $0x70] sm:$0xff]
        %v288 = vld [vmem:[#allocation5 + $0x78] sm:$0xff]
        %v289 = vld [vmem:[#allocation5 + $0x80] sm:$0xff]
        %v290 = vld [vmem:[#allocation5 + $0x88] sm:$0xff]
        %v291 = vld [vmem:[#allocation5 + $0x90] sm:$0xff]
        %v292 = vld [vmem:[#allocation5 + $0x98] sm:$0xff]
        %v293 = vld [vmem:[#allocation5 + $0xa0] sm:$0xff]
        %v294 = vld [vmem:[#allocation5 + $0xa8] sm:$0xff]
        %v295 = vld [vmem:[#allocation5 + $0xb0] sm:$0xff]
        %v296 = vld [vmem:[#allocation5 + $0xb8] sm:$0xff]
        %v297 = vld [vmem:[#allocation5 + $0xc0] sm:$0xff]
        %v298 = vld [vmem:[#allocation5 + $0xc8] sm:$0xff]
        %v299 = vld [vmem:[#allocation5 + $0xd0] sm:$0xff]
        %v300 = vld [vmem:[#allocation5 + $0xd8] sm:$0xff]
        %v301 = vld [vmem:[#allocation5 + $0xe0] sm:$0xff]
        %v302 = vld [vmem:[#allocation5 + $0xe8] sm:$0xff]
        %v303 = vld [vmem:[#allocation5 + $0xf0] sm:$0xff]
        %v304 = vld [vmem:[#allocation5 + $0xf8] sm:$0xff]
        %v337 = vunpack.c.l.b16 %v273
        %v338 = vunpack.c.h.b16 %v273
        %v339 = vunpack.c.l.b16 %v274
        %v340 = vunpack.c.h.b16 %v274
        %v341 = vunpack.c.l.b16 %v275
        %v342 = vunpack.c.h.b16 %v275
        %v343 = vunpack.c.l.b16 %v276
        %v344 = vunpack.c.h.b16 %v276
        %v345 = vunpack.c.l.b16 %v277
        %v346 = vunpack.c.h.b16 %v277
        %v347 = vunpack.c.l.b16 %v278
        %v348 = vunpack.c.h.b16 %v278
        %v349 = vunpack.c.l.b16 %v279
        %v350 = vunpack.c.h.b16 %v279
        %v351 = vunpack.c.l.b16 %v280
        %v352 = vunpack.c.h.b16 %v280
        %v353 = vunpack.c.l.b16 %v281
        %v354 = vunpack.c.h.b16 %v281
        %v355 = vunpack.c.l.b16 %v282
        %v356 = vunpack.c.h.b16 %v282
        %v357 = vunpack.c.l.b16 %v283
        %v358 = vunpack.c.h.b16 %v283
        %v359 = vunpack.c.l.b16 %v284
        %v360 = vunpack.c.h.b16 %v284
        %v361 = vunpack.c.l.b16 %v285
        %v362 = vunpack.c.h.b16 %v285
        %v363 = vunpack.c.l.b16 %v286
        %v364 = vunpack.c.h.b16 %v286
        %v365 = vunpack.c.l.b16 %v287
        %v366 = vunpack.c.h.b16 %v287
        %v367 = vunpack.c.l.b16 %v288
        %v368 = vunpack.c.h.b16 %v288
        %v369 = vunpack.c.l.b16 %v289
        %v370 = vunpack.c.h.b16 %v289
        %v371 = vunpack.c.l.b16 %v290
        %v372 = vunpack.c.h.b16 %v290
        %v373 = vunpack.c.l.b16 %v291
        %v374 = vunpack.c.h.b16 %v291
        %v375 = vunpack.c.l.b16 %v292
        %v376 = vunpack.c.h.b16 %v292
        %v377 = vunpack.c.l.b16 %v293
        %v378 = vunpack.c.h.b16 %v293
        %v379 = vunpack.c.l.b16 %v294
        %v380 = vunpack.c.h.b16 %v294
        %v381 = vunpack.c.l.b16 %v295
        %v382 = vunpack.c.h.b16 %v295
        %v383 = vunpack.c.l.b16 %v296
        %v384 = vunpack.c.h.b16 %v296
        %v385 = vunpack.c.l.b16 %v297
        %v386 = vunpack.c.h.b16 %v297
        %v387 = vunpack.c.l.b16 %v298
        %v388 = vunpack.c.h.b16 %v298
        %v389 = vunpack.c.l.b16 %v299
        %v390 = vunpack.c.h.b16 %v299
        %v391 = vunpack.c.l.b16 %v300
        %v392 = vunpack.c.h.b16 %v300
        %v393 = vunpack.c.l.b16 %v301
        %v394 = vunpack.c.h.b16 %v301
        %v395 = vunpack.c.l.b16 %v302
        %v396 = vunpack.c.h.b16 %v302
        %v397 = vunpack.c.l.b16 %v303
        %v398 = vunpack.c.h.b16 %v303
        %v399 = vunpack.c.l.b16 %v304
        %v400 = vunpack.c.h.b16 %v304
        %v401 = vpack.c.b16 %v339, %v337
        %v402 = vpack.c.b16 %v340, %v338
        %v403 = vpack.c.b16 %v343, %v341
        %v404 = vpack.c.b16 %v344, %v342
        %v405 = vpack.c.b16 %v347, %v345
        %v406 = vpack.c.b16 %v348, %v346
        %v407 = vpack.c.b16 %v351, %v349
        %v408 = vpack.c.b16 %v352, %v350
        %v409 = vpack.c.b16 %v355, %v353
        %v410 = vpack.c.b16 %v356, %v354
        %v411 = vpack.c.b16 %v359, %v357
        %v412 = vpack.c.b16 %v360, %v358
        %v413 = vpack.c.b16 %v363, %v361
        %v414 = vpack.c.b16 %v364, %v362
        %v415 = vpack.c.b16 %v367, %v365
        %v416 = vpack.c.b16 %v368, %v366
        %v417 = vpack.c.b16 %v371, %v369
        %v418 = vpack.c.b16 %v372, %v370
        %v419 = vpack.c.b16 %v375, %v373
        %v420 = vpack.c.b16 %v376, %v374
        %v421 = vpack.c.b16 %v379, %v377
        %v422 = vpack.c.b16 %v380, %v378
        %v423 = vpack.c.b16 %v383, %v381
        %v424 = vpack.c.b16 %v384, %v382
        %v425 = vpack.c.b16 %v387, %v385
        %v426 = vpack.c.b16 %v388, %v386
        %v427 = vpack.c.b16 %v391, %v389
        %v428 = vpack.c.b16 %v392, %v390
        %v429 = vpack.c.b16 %v395, %v393
        %v430 = vpack.c.b16 %v396, %v394
        %v431 = vpack.c.b16 %v399, %v397
        %v432 = vpack.c.b16 %v400, %v398
        %465 = vmatprep.subr.bf16.mxu0 %v256
        %466 = vmatpush1.bf16.msra.mxu0 %v255
        %467 = vmatprep.subr.bf16.mxu0 %v254
        %468 = vmatpush1.bf16.msra.mxu0 %v253
        %469 = vmatprep.subr.bf16.mxu0 %v252
        %470 = vmatpush1.bf16.msra.mxu0 %v251
        %471 = vmatprep.subr.bf16.mxu0 %v250
        %472 = vmatpush1.bf16.msra.mxu0 %v249
        %473 = vmatprep.subr.bf16.mxu0 %v248
        %474 = vmatpush1.bf16.msra.mxu0 %v247
        %475 = vmatprep.subr.bf16.mxu0 %v246
        %476 = vmatpush1.bf16.msra.mxu0 %v245
        %477 = vmatprep.subr.bf16.mxu0 %v244
        %478 = vmatpush1.bf16.msra.mxu0 %v243
        %479 = vmatprep.subr.bf16.mxu0 %v242
        %480 = vmatpush1.bf16.msra.mxu0 %v241
        %481 = vmatprep.subr.bf16.mxu0 %v272
        %482 = vmatpush2.bf16.msra.mxu0 %v271
        %483 = vmatprep.subr.bf16.mxu0 %v270
        %484 = vmatpush2.bf16.msra.mxu0 %v269
        %485 = vmatprep.subr.bf16.mxu0 %v268
        %486 = vmatpush2.bf16.msra.mxu0 %v267
        %487 = vmatprep.subr.bf16.mxu0 %v266
        %488 = vmatpush2.bf16.msra.mxu0 %v265
        %489 = vmatprep.subr.bf16.mxu0 %v264
        %490 = vmatpush2.bf16.msra.mxu0 %v263
        %491 = vmatprep.subr.bf16.mxu0 %v262
        %492 = vmatpush2.bf16.msra.mxu0 %v261
        %493 = vmatprep.subr.bf16.mxu0 %v260
        %494 = vmatpush2.bf16.msra.mxu0 %v259
        %495 = vmatprep.subr.bf16.mxu0 %v258
        %496 = vmatpush2.bf16.msra.mxu0 %v257
        %497 = vmatprep.mubr.bf16.mxu0 %v402
        %498 = vmatmul.mubr.bf16.gmra.mxu0 %v401
        %v499 = vpop.f32.mrf.mxu0
        %v500 = vadd.f32 0.0, %v499
        %v501 = vpop.f32.mrf.mxu0
        %v502 = vadd.f32 0.0, %v501
        %v503 = vpop.f32.mrf.mxu0
        %v504 = vadd.f32 0.0, %v503
        %v505 = vpop.f32.mrf.mxu0
        %v506 = vadd.f32 0.0, %v505
        %507 = vmatprep.mubr.bf16.mxu0 %v404
        %508 = vmatmul.mubr.bf16.gmra.mxu0 %v403
        %v509 = vpop.f32.mrf.mxu0
        %v510 = vadd.f32 0.0, %v509
        %v511 = vpop.f32.mrf.mxu0
        %v512 = vadd.f32 0.0, %v511
        %v513 = vpop.f32.mrf.mxu0
        %v514 = vadd.f32 0.0, %v513
        %v515 = vpop.f32.mrf.mxu0
        %v516 = vadd.f32 0.0, %v515
        %517 = vmatprep.mubr.bf16.mxu0 %v406
        %518 = vmatmul.mubr.bf16.gmra.mxu0 %v405
        %v519 = vpop.f32.mrf.mxu0
        %v520 = vadd.f32 0.0, %v519
        %v521 = vpop.f32.mrf.mxu0
        %v522 = vadd.f32 0.0, %v521
        %v523 = vpop.f32.mrf.mxu0
        %v524 = vadd.f32 0.0, %v523
        %v525 = vpop.f32.mrf.mxu0
        %v526 = vadd.f32 0.0, %v525
        %527 = vmatprep.mubr.bf16.mxu0 %v408
        %528 = vmatmul.mubr.bf16.gmra.mxu0 %v407
        %v529 = vpop.f32.mrf.mxu0
        %v530 = vadd.f32 0.0, %v529
        %v531 = vpop.f32.mrf.mxu0
        %v532 = vadd.f32 0.0, %v531
        %v533 = vpop.f32.mrf.mxu0
        %v534 = vadd.f32 0.0, %v533
        %v535 = vpop.f32.mrf.mxu0
        %v536 = vadd.f32 0.0, %v535
        %537 = vmatprep.mubr.bf16.mxu0 %v410
        %538 = vmatmul.mubr.bf16.gmra.mxu0 %v409
        %v539 = vpop.f32.mrf.mxu0
        %v540 = vadd.f32 0.0, %v539
        %v541 = vpop.f32.mrf.mxu0
        %v542 = vadd.f32 0.0, %v541
        %v543 = vpop.f32.mrf.mxu0
        %v544 = vadd.f32 0.0, %v543
        %v545 = vpop.f32.mrf.mxu0
        %v546 = vadd.f32 0.0, %v545
        %547 = vmatprep.mubr.bf16.mxu0 %v412
        %548 = vmatmul.mubr.bf16.gmra.mxu0 %v411
        %v549 = vpop.f32.mrf.mxu0
        %v550 = vadd.f32 0.0, %v549
        %v551 = vpop.f32.mrf.mxu0
        %v552 = vadd.f32 0.0, %v551
        %v553 = vpop.f32.mrf.mxu0
        %v554 = vadd.f32 0.0, %v553
        %v555 = vpop.f32.mrf.mxu0
        %v556 = vadd.f32 0.0, %v555
        %557 = vmatprep.mubr.bf16.mxu0 %v414
        %558 = vmatmul.mubr.bf16.gmra.mxu0 %v413
        %v559 = vpop.f32.mrf.mxu0
        %v560 = vadd.f32 0.0, %v559
        %v561 = vpop.f32.mrf.mxu0
        %v562 = vadd.f32 0.0, %v561
        %v563 = vpop.f32.mrf.mxu0
        %v564 = vadd.f32 0.0, %v563
        %v565 = vpop.f32.mrf.mxu0
        %v566 = vadd.f32 0.0, %v565
        %567 = vmatprep.mubr.bf16.mxu0 %v416
        %568 = vmatmul.mubr.bf16.gmra.mxu0 %v415
        %v569 = vpop.f32.mrf.mxu0
        %v570 = vadd.f32 0.0, %v569
        %v571 = vpop.f32.mrf.mxu0
        %v572 = vadd.f32 0.0, %v571
        %v573 = vpop.f32.mrf.mxu0
        %v574 = vadd.f32 0.0, %v573
        %v575 = vpop.f32.mrf.mxu0
        %v576 = vadd.f32 0.0, %v575
        %577 = vmatprep.mubr.bf16.mxu0 %v418
        %578 = vmatmul.mubr.bf16.gmra.mxu0 %v417
        %v579 = vpop.f32.mrf.mxu0
        %v580 = vadd.f32 0.0, %v579
        %v581 = vpop.f32.mrf.mxu0
        %v582 = vadd.f32 0.0, %v581
        %v583 = vpop.f32.mrf.mxu0
        %v584 = vadd.f32 0.0, %v583
        %v585 = vpop.f32.mrf.mxu0
        %v586 = vadd.f32 0.0, %v585
        %587 = vmatprep.mubr.bf16.mxu0 %v420
        %588 = vmatmul.mubr.bf16.gmra.mxu0 %v419
        %v589 = vpop.f32.mrf.mxu0
        %v590 = vadd.f32 0.0, %v589
        %v591 = vpop.f32.mrf.mxu0
        %v592 = vadd.f32 0.0, %v591
        %v593 = vpop.f32.mrf.mxu0
        %v594 = vadd.f32 0.0, %v593
        %v595 = vpop.f32.mrf.mxu0
        %v596 = vadd.f32 0.0, %v595
        %597 = vmatprep.mubr.bf16.mxu0 %v422
        %598 = vmatmul.mubr.bf16.gmra.mxu0 %v421
        %v599 = vpop.f32.mrf.mxu0
        %v600 = vadd.f32 0.0, %v599
        %v601 = vpop.f32.mrf.mxu0
        %v602 = vadd.f32 0.0, %v601
        %v603 = vpop.f32.mrf.mxu0
        %v604 = vadd.f32 0.0, %v603
        %v605 = vpop.f32.mrf.mxu0
        %v606 = vadd.f32 0.0, %v605
        %607 = vmatprep.mubr.bf16.mxu0 %v424
        %608 = vmatmul.mubr.bf16.gmra.mxu0 %v423
        %v609 = vpop.f32.mrf.mxu0
        %v610 = vadd.f32 0.0, %v609
        %v611 = vpop.f32.mrf.mxu0
        %v612 = vadd.f32 0.0, %v611
        %v613 = vpop.f32.mrf.mxu0
        %v614 = vadd.f32 0.0, %v613
        %v615 = vpop.f32.mrf.mxu0
        %v616 = vadd.f32 0.0, %v615
        %617 = vmatprep.mubr.bf16.mxu0 %v426
        %618 = vmatmul.mubr.bf16.gmra.mxu0 %v425
        %v619 = vpop.f32.mrf.mxu0
        %v620 = vadd.f32 0.0, %v619
        %v621 = vpop.f32.mrf.mxu0
        %v622 = vadd.f32 0.0, %v621
        %v623 = vpop.f32.mrf.mxu0
        %v624 = vadd.f32 0.0, %v623
        %v625 = vpop.f32.mrf.mxu0
        %v626 = vadd.f32 0.0, %v625
        %627 = vmatprep.mubr.bf16.mxu0 %v428
        %628 = vmatmul.mubr.bf16.gmra.mxu0 %v427
        %v629 = vpop.f32.mrf.mxu0
        %v630 = vadd.f32 0.0, %v629
        %v631 = vpop.f32.mrf.mxu0
        %v632 = vadd.f32 0.0, %v631
        %v633 = vpop.f32.mrf.mxu0
        %v634 = vadd.f32 0.0, %v633
        %v635 = vpop.f32.mrf.mxu0
        %v636 = vadd.f32 0.0, %v635
        %637 = vmatprep.mubr.bf16.mxu0 %v430
        %638 = vmatmul.mubr.bf16.gmra.mxu0 %v429
        %v639 = vpop.f32.mrf.mxu0
        %v640 = vadd.f32 0.0, %v639
        %v641 = vpop.f32.mrf.mxu0
        %v642 = vadd.f32 0.0, %v641
        %v643 = vpop.f32.mrf.mxu0
        %v644 = vadd.f32 0.0, %v643
        %v645 = vpop.f32.mrf.mxu0
        %v646 = vadd.f32 0.0, %v645
        %647 = vmatprep.mubr.bf16.mxu0 %v432
        %648 = vmatmul.mubr.bf16.gmra.mxu0 %v431
        %v649 = vpop.f32.mrf.mxu0
        %v650 = vadd.f32 0.0, %v649
        %v651 = vpop.f32.mrf.mxu0
        %v652 = vadd.f32 0.0, %v651
        %v653 = vpop.f32.mrf.mxu0
        %v654 = vadd.f32 0.0, %v653
        %v655 = vpop.f32.mrf.mxu0
        %v656 = vadd.f32 0.0, %v655
        %657 = vdwg.mxu0
        %v658 = vpack.c.bf16 %v504, %v500
        %v659 = vpack.c.bf16 %v506, %v502
        %v660 = vpack.c.bf16 %v514, %v510
        %v661 = vpack.c.bf16 %v516, %v512
        %v662 = vpack.c.bf16 %v524, %v520
        %v663 = vpack.c.bf16 %v526, %v522
        %v664 = vpack.c.bf16 %v534, %v530
        %v665 = vpack.c.bf16 %v536, %v532
        %v666 = vpack.c.bf16 %v544, %v540
        %v667 = vpack.c.bf16 %v546, %v542
        %v668 = vpack.c.bf16 %v554, %v550
        %v669 = vpack.c.bf16 %v556, %v552
        %v670 = vpack.c.bf16 %v564, %v560
        %v671 = vpack.c.bf16 %v566, %v562
        %v672 = vpack.c.bf16 %v574, %v570
        %v673 = vpack.c.bf16 %v576, %v572
        %v674 = vpack.c.bf16 %v584, %v580
        %v675 = vpack.c.bf16 %v586, %v582
        %v676 = vpack.c.bf16 %v594, %v590
        %v677 = vpack.c.bf16 %v596, %v592
        %v678 = vpack.c.bf16 %v604, %v600
        %v679 = vpack.c.bf16 %v606, %v602
        %v680 = vpack.c.bf16 %v614, %v610
        %v681 = vpack.c.bf16 %v616, %v612
        %v682 = vpack.c.bf16 %v624, %v620
        %v683 = vpack.c.bf16 %v626, %v622
        %v684 = vpack.c.bf16 %v634, %v630
        %v685 = vpack.c.bf16 %v636, %v632
        %v686 = vpack.c.bf16 %v644, %v640
        %v687 = vpack.c.bf16 %v646, %v642
        %v688 = vpack.c.bf16 %v654, %v650
        %v689 = vpack.c.bf16 %v656, %v652
        %v722 = vunpack.c.l.b16 %v658
        %v723 = vunpack.c.l.b16 %v659
        %v724 = vunpack.c.h.b16 %v658
        %v725 = vunpack.c.h.b16 %v659
        %v726 = vunpack.c.l.b16 %v660
        %v727 = vunpack.c.l.b16 %v661
        %v728 = vunpack.c.h.b16 %v660
        %v729 = vunpack.c.h.b16 %v661
        %v730 = vunpack.c.l.b16 %v662
        %v731 = vunpack.c.l.b16 %v663
        %v732 = vunpack.c.h.b16 %v662
        %v733 = vunpack.c.h.b16 %v663
        %v734 = vunpack.c.l.b16 %v664
        %v735 = vunpack.c.l.b16 %v665
        %v736 = vunpack.c.h.b16 %v664
        %v737 = vunpack.c.h.b16 %v665
        %v738 = vunpack.c.l.b16 %v666
        %v739 = vunpack.c.l.b16 %v667
        %v740 = vunpack.c.h.b16 %v666
        %v741 = vunpack.c.h.b16 %v667
        %v742 = vunpack.c.l.b16 %v668
        %v743 = vunpack.c.l.b16 %v669
        %v744 = vunpack.c.h.b16 %v668
        %v745 = vunpack.c.h.b16 %v669
        %v746 = vunpack.c.l.b16 %v670
        %v747 = vunpack.c.l.b16 %v671
        %v748 = vunpack.c.h.b16 %v670
        %v749 = vunpack.c.h.b16 %v671
        %v750 = vunpack.c.l.b16 %v672
        %v751 = vunpack.c.l.b16 %v673
        %v752 = vunpack.c.h.b16 %v672
        %v753 = vunpack.c.h.b16 %v673
        %v754 = vunpack.c.l.b16 %v674
        %v755 = vunpack.c.l.b16 %v675
        %v756 = vunpack.c.h.b16 %v674
        %v757 = vunpack.c.h.b16 %v675
        %v758 = vunpack.c.l.b16 %v676
        %v759 = vunpack.c.l.b16 %v677
        %v760 = vunpack.c.h.b16 %v676
        %v761 = vunpack.c.h.b16 %v677
        %v762 = vunpack.c.l.b16 %v678
        %v763 = vunpack.c.l.b16 %v679
        %v764 = vunpack.c.h.b16 %v678
        %v765 = vunpack.c.h.b16 %v679
        %v766 = vunpack.c.l.b16 %v680
        %v767 = vunpack.c.l.b16 %v681
        %v768 = vunpack.c.h.b16 %v680
        %v769 = vunpack.c.h.b16 %v681
        %v770 = vunpack.c.l.b16 %v682
        %v771 = vunpack.c.l.b16 %v683
        %v772 = vunpack.c.h.b16 %v682
        %v773 = vunpack.c.h.b16 %v683
        %v774 = vunpack.c.l.b16 %v684
        %v775 = vunpack.c.l.b16 %v685
        %v776 = vunpack.c.h.b16 %v684
        %v777 = vunpack.c.h.b16 %v685
        %v778 = vunpack.c.l.b16 %v686
        %v779 = vunpack.c.l.b16 %v687
        %v780 = vunpack.c.h.b16 %v686
        %v781 = vunpack.c.h.b16 %v687
        %v782 = vunpack.c.l.b16 %v688
        %v783 = vunpack.c.l.b16 %v689
        %v784 = vunpack.c.h.b16 %v688
        %v785 = vunpack.c.h.b16 %v689
        %v786 = vpack.c.b16 %v723, %v722
        %v787 = vpack.c.b16 %v725, %v724
        %v788 = vpack.c.b16 %v727, %v726
        %v789 = vpack.c.b16 %v729, %v728
        %v790 = vpack.c.b16 %v731, %v730
        %v791 = vpack.c.b16 %v733, %v732
        %v792 = vpack.c.b16 %v735, %v734
        %v793 = vpack.c.b16 %v737, %v736
        %v794 = vpack.c.b16 %v739, %v738
        %v795 = vpack.c.b16 %v741, %v740
        %v796 = vpack.c.b16 %v743, %v742
        %v797 = vpack.c.b16 %v745, %v744
        %v798 = vpack.c.b16 %v747, %v746
        %v799 = vpack.c.b16 %v749, %v748
        %v800 = vpack.c.b16 %v751, %v750
        %v801 = vpack.c.b16 %v753, %v752
        %v802 = vpack.c.b16 %v755, %v754
        %v803 = vpack.c.b16 %v757, %v756
        %v804 = vpack.c.b16 %v759, %v758
        %v805 = vpack.c.b16 %v761, %v760
        %v806 = vpack.c.b16 %v763, %v762
        %v807 = vpack.c.b16 %v765, %v764
        %v808 = vpack.c.b16 %v767, %v766
        %v809 = vpack.c.b16 %v769, %v768
        %v810 = vpack.c.b16 %v771, %v770
        %v811 = vpack.c.b16 %v773, %v772
        %v812 = vpack.c.b16 %v775, %v774
        %v813 = vpack.c.b16 %v777, %v776
        %v814 = vpack.c.b16 %v779, %v778
        %v815 = vpack.c.b16 %v781, %v780
        %v816 = vpack.c.b16 %v783, %v782
        %v817 = vpack.c.b16 %v785, %v784
        %850 = vst [vmem:[%s176] sm:$0xff] %v786
        %851 = vst [vmem:[%s176 + $0x8] sm:$0xff] %v787
        %852 = vst [vmem:[%s176 + $0x10] sm:$0xff] %v788
        %853 = vst [vmem:[%s176 + $0x18] sm:$0xff] %v789
        %854 = vst [vmem:[%s176 + $0x20] sm:$0xff] %v790
        %855 = vst [vmem:[%s176 + $0x28] sm:$0xff] %v791
        %856 = vst [vmem:[%s176 + $0x30] sm:$0xff] %v792
        %857 = vst [vmem:[%s176 + $0x38] sm:$0xff] %v793
        %858 = vst [vmem:[%s176 + $0x40] sm:$0xff] %v794
        %859 = vst [vmem:[%s176 + $0x48] sm:$0xff] %v795
        %860 = vst [vmem:[%s176 + $0x50] sm:$0xff] %v796
        %861 = vst [vmem:[%s176 + $0x58] sm:$0xff] %v797
        %862 = vst [vmem:[%s176 + $0x60] sm:$0xff] %v798
        %863 = vst [vmem:[%s176 + $0x68] sm:$0xff] %v799
        %864 = vst [vmem:[%s176 + $0x70] sm:$0xff] %v800
        %865 = vst [vmem:[%s176 + $0x78] sm:$0xff] %v801
        %866 = vst [vmem:[%s176 + $0x80] sm:$0xff] %v802
        %867 = vst [vmem:[%s176 + $0x88] sm:$0xff] %v803
        %868 = vst [vmem:[%s176 + $0x90] sm:$0xff] %v804
        %869 = vst [vmem:[%s176 + $0x98] sm:$0xff] %v805
        %870 = vst [vmem:[%s176 + $0xa0] sm:$0xff] %v806
        %871 = vst [vmem:[%s176 + $0xa8] sm:$0xff] %v807
        %872 = vst [vmem:[%s176 + $0xb0] sm:$0xff] %v808
        %873 = vst [vmem:[%s176 + $0xb8] sm:$0xff] %v809
        %874 = vst [vmem:[%s176 + $0xc0] sm:$0xff] %v810
        %875 = vst [vmem:[%s176 + $0xc8] sm:$0xff] %v811
        %876 = vst [vmem:[%s176 + $0xd0] sm:$0xff] %v812
        %877 = vst [vmem:[%s176 + $0xd8] sm:$0xff] %v813
        %878 = vst [vmem:[%s176 + $0xe0] sm:$0xff] %v814
        %879 = vst [vmem:[%s176 + $0xe8] sm:$0xff] %v815
        %880 = vst [vmem:[%s176 + $0xf0] sm:$0xff] %v816
        %881 = vst [vmem:[%s176 + $0xf8] sm:$0xff] %v817
        %s882 = sand.u32 %s75, 1
        %s883 = scalar_lea.sflag [#allocation4], %s882
        %s884 = sand.u32 %s75, 1
        %s885 = smul.addr %s884, 256
        %s886 = scalar_lea.vmem [#allocation7], %s885
        // Predicated region
        $region37: #{tpu_custom_call.1} parent=27 // pred_check
          %p887 = pneg %p85
        $region38: #{tpu_custom_call.1} parent=27 // pred_check_branch
          %889 = sbr.rel (%p887) target = $region40
        $region39: #{tpu_custom_call.1} parent=27 // pred_region
          %s891 = ssub.s32 4096, 4096
          %892 = vsyncadd %s883, %s891
          %s893 = smul.addr %s20, 64
          %s894 = smul.addr %s893, 64
          %s895 = scalar_lea.hbm %s2, %s894
          %s896 = sshll.u32 %s886, 4
          %s897 = int_to_ptr.vmem [resolvable:$true] %s896
          %902 = dma.vmem_to_hbm [thread:$0]  %s897, 4096, %s895, %s883, 128, 128, 8
        $region40: #{tpu_custom_call.1} parent=27 // pred_fallthru
          _
      $region28: #{tpu_custom_call.1} parent=5 // pred_fallthru
        _
      %p903 = scmp.le.s32.totalorder 2, %s15
      // Predicated region
      $region41: #{tpu_custom_call.1} parent=5 // pred_check
        %p904 = pneg %p903
      $region42: #{tpu_custom_call.1} parent=5 // pred_check_branch
        %906 = sbr.rel (%p904) target = $region44
      $region43: #{tpu_custom_call.1} parent=5 // pred_region
        %s907 = ssub.s32 %s15, 2
        // Predicated region
        $region45: #{tpu_custom_call.1} parent=43 // pred_check
          %p908 = pneg %p91
        $region46: #{tpu_custom_call.1} parent=43 // pred_check_branch
          %910 = sbr.rel (%p908) target = $region48
        $region47: #{tpu_custom_call.1} parent=43 // pred_region
          %s911 = sand.u32 %s76, 1
          %s912 = scalar_lea.sflag [#allocation4], %s911
          %s913 = sand.u32 %s76, 1
          %s914 = smul.addr %s913, 256
          %s915 = scalar_lea.vmem [#allocation7], %s914
          %916 = dma.done %s912, 4096
        $region48: #{tpu_custom_call.1} parent=43 // pred_fallthru
          _
      $region44: #{tpu_custom_call.1} parent=5 // pred_fallthru
        _
    $region6: #{tpu_custom_call.1} parent=1 // loop_footer
      %s19 = sadd.s32 1, %s15
    $region7: #{tpu_custom_call.1} parent=1 // loop_footer_branch
      %14 = sbr.rel target = $region3
    $region8: #{tpu_custom_call.1} parent=1 // loop_exit
      _
    %917 = vsyncpa [#allocation3], 1
    %s918 = scalar_lea.sflag [#allocation3], 1
    %919 = vsyncpa %s918, 1
    %920 = vsyncpa [#allocation6], 1
    %921 = vsyncpa [#allocation4], 1
    %s922 = scalar_lea.sflag [#allocation4], 1
    %923 = vsyncpa %s922, 1

</llo_original>
